<compile_context>
chip_gen: v5e
topology: v5e:2x2
jax: 0.10.0
libtpu: 0.0.40
codegen_flags: <defaults>
</compile_context>

<pallas_src>
import jax
import jax.numpy as jnp
from jax.experimental import pallas as pl
from jax.experimental.pallas import tpu as pltpu


def _round_up(x, m):
    return ((x + m - 1) // m) * m


# ----------------------------------------------------------------------------
# FC (nn.Linear) Pallas kernel
# ----------------------------------------------------------------------------

def _fc_kernel(x_ref, w_ref, b_ref, o_ref):
    """One (tm, tn) output tile, accumulated in-place over the K grid axis.

    x_ref: (tm, tk) bf16   activation tile
    w_ref: (tn, tk) bf16   weight tile in PyTorch (out, in) layout
    b_ref: (1,  tn) f32    bias tile
    o_ref: (tm, tn) f32    output tile (resident across K -> the accumulator)
    """
    @pl.when(pl.program_id(2) == 0)
    def _():
        o_ref[...] = jnp.zeros_like(o_ref)

    # x @ w.T on the MXU with f32 accumulation (no transpose materialized).
    o_ref[...] += jax.lax.dot_general(
        x_ref[...], w_ref[...],
        dimension_numbers=(((1,), (1,)), ((), ())),
        preferred_element_type=jnp.float32)

    @pl.when(pl.program_id(2) == pl.num_programs(2) - 1)
    def _():
        o_ref[...] += b_ref[...]


def _choose_fc_tiles(B, D, KD):
    """Tile sizes for the (B, KD) @ (D, KD)^T matmul."""
    # bf16 packs 16 rows per sublane group -> prefer 16-aligned M tiles.
    m_align = 16 if B >= 16 else 8
    tm = min(_round_up(B, m_align), 512)
    tn = min(_round_up(D, 128), 256)
    tk = min(_round_up(KD, 128), 2048)
    # v7x megacore: guarantee >= 2 blocks along a "parallel" axis when possible
    # so both TensorCores get work.
    if _round_up(B, tm) // tm == 1 and _round_up(D, tn) // tn == 1 and tn > 128:
        tn = 128
    # TODO(synk): if the grid is still 1x1 over (M, N), K could be split across
    # cores with CORE_PARALLEL + per-core partial sums.
    return tm, tn, tk


def prepare_fc_params(w, b, tn, tk):
    """Pad + bf16-cast the Linear parameters ONCE per parameter set.

    w: (D, KD) PyTorch (out, in) layout, b: (D,).
    Returns (w_p: (D_p, KD_p) bf16, b_p: (1, D_p) f32).
    """
    D, KD = w.shape
    D_p = _round_up(D, tn)
    KD_p = _round_up(KD, tk)
    w_p = jnp.zeros((D_p, KD_p), jnp.bfloat16).at[:D, :KD].set(
        w.astype(jnp.bfloat16))
    b_p = jnp.zeros((1, D_p), jnp.float32).at[0, :D].set(
        b.astype(jnp.float32))
    return w_p, b_p


def fc_pallas(x, w_p, b_p, out_dim, tm, tn, tk):
    """Fused Linear on pre-padded params.

    x:   (B, KD) f32 activations (padded + cast per call)
    w_p: (D_p, KD_p) bf16 pre-padded weights,  b_p: (1, D_p) f32
    Returns (B, out_dim) f32.
    """
    B, KD = x.shape
    D_p, KD_p = w_p.shape
    B_p = _round_up(B, tm)

    # Only the activation needs per-call padding (zero pad contributes 0).
    x_p = jnp.zeros((B_p, KD_p), jnp.bfloat16).at[:B, :KD].set(
        x.astype(jnp.bfloat16))

    grid = (B_p // tm, D_p // tn, KD_p // tk)

    # Double-buffered inputs + resident f32 output tile, with headroom.
    vmem_bytes = (2 * tm * tk * 2        # x tiles (bf16)
                  + 2 * tn * tk * 2      # w tiles (bf16)
                  + 2 * tn * 4           # bias tiles (f32)
                  + 2 * tm * tn * 4)     # out tiles (f32)
    vmem_limit = min(max(vmem_bytes + (4 << 20), 32 << 20), 48 << 20)

    out = pl.pallas_call(
        _fc_kernel,
        out_shape=jax.ShapeDtypeStruct((B_p, D_p), jnp.float32),
        grid_spec=pltpu.PrefetchScalarGridSpec(
            num_scalar_prefetch=0,
            grid=grid,
            in_specs=[
                pl.BlockSpec((tm, tk), lambda i, j, kk: (i, kk)),   # x
                pl.BlockSpec((tn, tk), lambda i, j, kk: (j, kk)),   # w (out, in)
                pl.BlockSpec((1, tn), lambda i, j, kk: (0, j)),     # bias
            ],
            out_specs=pl.BlockSpec((tm, tn), lambda i, j, kk: (i, j)),
        ),
        compiler_params=pltpu.CompilerParams(
            dimension_semantics=("parallel", "parallel", "arbitrary"),
            vmem_limit_bytes=vmem_limit),
        cost_estimate=pl.CostEstimate(
            flops=2 * B_p * KD_p * D_p,
            transcendentals=0,
            bytes_accessed=(B_p * KD_p * 2 + D_p * KD_p * 2
                            + D_p * 4 + B_p * D_p * 4)),
    )(x_p, w_p, b_p)

    return out[:B, :out_dim]


# ----------------------------------------------------------------------------
# SortPooling (SP) + module forward
# ----------------------------------------------------------------------------

def sort_pool(feat, k):
    """DGL SortPooling for a batch of equal-sized graphs.

    feat: (B, N, D) node features, N >= k.   returns: (B, k * D)
    """
    B, N, D = feat.shape
    # Rank nodes (descending) by their max feature value == last element of
    # the ascending-sorted row; lax.top_k avoids a full argsort over N.
    node_key = jnp.max(feat, axis=-1)                       # (B, N)
    _, topk_idx = jax.lax.top_k(node_key, k)                # (B, k) descending
    gathered = jnp.take_along_axis(
        feat, topk_idx[..., None], axis=1)                  # (B, k, D)
    gathered_sorted = jnp.sort(gathered, axis=-1)           # ascending feat sort
    return gathered_sorted.reshape(B, k * D)


def make_sort_pooling(fc_weight, fc_bias, k, batch_size):
    """Build a jitted SortPooling forward with weights padded/cast ONCE.

    fc_weight: (D, k*D) PyTorch nn.Linear (out, in) layout
    fc_bias:   (D,)
    """
    D, KD = fc_weight.shape
    tm, tn, tk = _choose_fc_tiles(batch_size, D, KD)
    # Parameter prep happens eagerly, exactly once per parameter set.
    w_p, b_p = prepare_fc_params(fc_weight, fc_bias, tn, tk)

    @jax.jit
    def forward(feat):
        pooled = sort_pool(feat, k)                          # (B, k*D)
        return fc_pallas(pooled, w_p, b_p, D, tm, tn, tk)    # (B, D)

    return forward


def sort_pooling_forward(feat, fc_weight, fc_bias, k):
    """Convenience one-shot forward (prefers make_sort_pooling for reuse)."""
    return make_sort_pooling(fc_weight, fc_bias, k, feat.shape[0])(feat)


if __name__ == "__main__":
    # batch of 2 graphs, 8 nodes each, hidden_dim=32, k=4
    B, N, D, K = 2, 8, 32, 4

    key = jax.random.PRNGKey(0)
    k_feat, k_w, k_b = jax.random.split(key, 3)

    feat = jax.random.normal(k_feat, (B, N, D), dtype=jnp.float32)

    # Deterministic Linear(hidden_dim*k, hidden_dim) init (uniform, PyTorch-like bound)
    bound = 1.0 / jnp.sqrt(jnp.float32(D * K))
    fc_weight = jax.random.uniform(k_w, (D, D * K), jnp.float32, -bound, bound)
    fc_bias = jax.random.uniform(k_b, (D,), jnp.float32, -bound, bound)

    forward = make_sort_pooling(fc_weight, fc_bias, K, batch_size=B)
    out = forward(feat)
    out = jax.block_until_ready(out)
    assert out.shape == (B, D)

    # Pure-JAX reference (same bf16-in / f32-accumulate path as the kernel).
    pooled = sort_pool(feat, K)
    ref = jax.lax.dot_general(
        pooled.astype(jnp.bfloat16), fc_weight.astype(jnp.bfloat16),
        dimension_numbers=(((1,), (1,)), ((), ())),
        preferred_element_type=jnp.float32) + fc_bias
    assert jnp.allclose(out, ref, atol=1e-3, rtol=1e-3)

    print("KERNEL_OK")
</pallas_src>

<mosaic_0001>
module attributes {stable_mosaic.version = 11 : i64} {
  func.func @_fc_kernel(%arg0: i32, %arg1: i32, %arg2: i32, %arg3: memref<8x128xbf16, #tpu.memory_space<vmem>>, %arg4: memref<128x128xbf16, #tpu.memory_space<vmem>>, %arg5: memref<1x128xf32, #tpu.memory_space<vmem>>, %arg6: memref<8x128xf32, #tpu.memory_space<vmem>>) attributes {dimension_semantics = [#tpu.dimension_semantics<parallel>, #tpu.dimension_semantics<parallel>, #tpu.dimension_semantics<arbitrary>], iteration_bounds = array<i64: 1, 1, 1>, scalar_prefetch = 0 : i64, scratch_operands = 0 : i64, tpu.core_type = #tpu.core_type<tc>, window_params = [{transform_indices = @transform_0, window_bounds = array<i64: 8, 128>}, {transform_indices = @transform_1, window_bounds = array<i64: 128, 128>}, {transform_indices = @transform_2, window_bounds = array<i64: 1, 128>}, {transform_indices = @transform_3, window_bounds = array<i64: 8, 128>}]} {
    %c0_i32 = arith.constant 0 : i32
    %0 = arith.cmpi eq, %arg2, %c0_i32 : i32
    %1 = arith.extui %0 : i1 to i32
    %c0_i32_0 = arith.constant 0 : i32
    %2 = arith.cmpi ne, %1, %c0_i32_0 : i32
    scf.if %2 {
      %cst_10 = arith.constant 0.000000e+00 : f32
      %12 = vector.broadcast %cst_10 : f32 to vector<8x128xf32>
      %c0_11 = arith.constant 0 : index
      %c0_12 = arith.constant 0 : index
      %13 = vector.load %arg6[%c0_11, %c0_12] : memref<8x128xf32, #tpu.memory_space<vmem>>, vector<8x128xf32>
      tpu.vector_store %arg6[%c0_11, %c0_12], %12 {strides = array<i32>} : memref<8x128xf32, #tpu.memory_space<vmem>>, vector<8x128xf32>,
    } else {
    }
    %c0 = arith.constant 0 : index
    %c0_1 = arith.constant 0 : index
    %3 = vector.load %arg6[%c0, %c0_1] : memref<8x128xf32, #tpu.memory_space<vmem>>, vector<8x128xf32>
    %c0_2 = arith.constant 0 : index
    %c0_3 = arith.constant 0 : index
    %4 = vector.load %arg3[%c0_2, %c0_3] : memref<8x128xbf16, #tpu.memory_space<vmem>>, vector<8x128xbf16>
    %c0_4 = arith.constant 0 : index
    %c0_5 = arith.constant 0 : index
    %5 = vector.load %arg4[%c0_4, %c0_5] : memref<128x128xbf16, #tpu.memory_space<vmem>>, vector<128x128xbf16>
    %cst = arith.constant dense<0.000000e+00> : vector<8x128xf32>
    %6 = tpu.matmul %4, %5, %cst {dimension_numbers = #tpu.dot_dimension_numbers<[1], [1], [0], [0], [0, 0, 1, 0], [], []>} : vector<8x128xbf16>, vector<128x128xbf16>, vector<8x128xf32> -> vector<8x128xf32>
    %7 = arith.addf %3, %6 : vector<8x128xf32>
    %c0_6 = arith.constant 0 : index
    %c0_7 = arith.constant 0 : index
    %8 = vector.load %arg6[%c0_6, %c0_7] : memref<8x128xf32, #tpu.memory_space<vmem>>, vector<8x128xf32>
    tpu.vector_store %arg6[%c0_6, %c0_7], %7 {strides = array<i32>} : memref<8x128xf32, #tpu.memory_space<vmem>>, vector<8x128xf32>,
    %c0_i32_8 = arith.constant 0 : i32
    %9 = arith.cmpi eq, %arg2, %c0_i32_8 : i32
    %10 = arith.extui %9 : i1 to i32
    %c0_i32_9 = arith.constant 0 : i32
    %11 = arith.cmpi ne, %10, %c0_i32_9 : i32
    scf.if %11 {
      %c0_10 = arith.constant 0 : index
      %c0_11 = arith.constant 0 : index
      %12 = vector.load %arg6[%c0_10, %c0_11] : memref<8x128xf32, #tpu.memory_space<vmem>>, vector<8x128xf32>
      %c0_12 = arith.constant 0 : index
      %c0_13 = arith.constant 0 : index
      %13 = vector.load %arg5[%c0_12, %c0_13] : memref<1x128xf32, #tpu.memory_space<vmem>>, vector<1x128xf32>
      %14 = vector.broadcast %13 : vector<1x128xf32> to vector<8x128xf32>
      %15 = arith.addf %12, %14 : vector<8x128xf32>
      %c0_14 = arith.constant 0 : index
      %c0_15 = arith.constant 0 : index
      %16 = vector.load %arg6[%c0_14, %c0_15] : memref<8x128xf32, #tpu.memory_space<vmem>>, vector<8x128xf32>
      tpu.vector_store %arg6[%c0_14, %c0_15], %15 {strides = array<i32>} : memref<8x128xf32, #tpu.memory_space<vmem>>, vector<8x128xf32>,
    } else {
    }
    return
  }
  func.func @transform_0(%arg0: i32, %arg1: i32, %arg2: i32) -> (i32, i32) {
    %c0_i32 = arith.constant 0 : i32
    return %arg0, %arg2 : i32, i32
  }
  func.func @transform_1(%arg0: i32, %arg1: i32, %arg2: i32) -> (i32, i32) {
    %c0_i32 = arith.constant 0 : i32
    return %arg1, %arg2 : i32, i32
  }
  func.func @transform_2(%arg0: i32, %arg1: i32, %arg2: i32) -> (i32, i32) {
    %c0_i32 = arith.constant 0 : i32
    %c0_i32_0 = arith.constant 0 : i32
    return %c0_i32, %arg1 : i32, i32
  }
  func.func @transform_3(%arg0: i32, %arg1: i32, %arg2: i32) -> (i32, i32) {
    %c0_i32 = arith.constant 0 : i32
    return %arg0, %arg1 : i32, i32
  }
}

</mosaic_0001>

<llo_original>
// kernel: forward.1
$region0: #{forward.1}
  #allocation0 [shape = 'u32[]', space=smem, size = 0x4, offset = 0x4, fixed_abs, tag = 'smem constant byte address 0x4 - core index']
  #allocation1 [shape = 'u32[72,128]{1,0:T(1,128)}', space=vmem, size = 0x9000, scoped, tag = 'internal scratch']
  %s0 = inlined_call_operand.vmem [shape: bf16[8,128], index: 0, kind: input, shape index: {}]
  %s1 = inlined_call_operand.vmem [shape: bf16[128,128], index: 1, kind: input, shape index: {}]
  %s2 = inlined_call_operand.vmem [shape: f32[1,128], index: 2, kind: input, shape index: {}]
  %s3 = inlined_call_operand.vmem [shape: f32[8,128], index: 3, kind: output, shape index: {}]
  %s4 = sld [smem:[#allocation0]]
  $region30: #{forward.1} parent=0
    _
  %s6 = ssub.s32 1, %s4
  %s7 = scalar_select 0, %s6, %s4
  // Predicated region
  $region2: #{forward.1} parent=0 // pred_check
    _
  $region3: #{forward.1} parent=0 // pred_check_branch
    %9 = sbr.rel (0) target = $region5
  $region4: #{forward.1} parent=0 // pred_region
    _
  $region5: #{forward.1} parent=0 // pred_fallthru
    _
  // Predicated region
  $region6: #{forward.1} parent=0 // pred_check
    _
  $region7: #{forward.1} parent=0 // pred_check_branch
    %11 = sbr.rel (0) target = $region9
  $region8: #{forward.1} parent=0 // pred_region
    _
  $region9: #{forward.1} parent=0 // pred_fallthru
    _
  // Predicated region
  $region10: #{forward.1} parent=0 // pred_check
    _
  $region11: #{forward.1} parent=0 // pred_check_branch
    %13 = sbr.rel (0) target = $region13
  $region12: #{forward.1} parent=0 // pred_region
    _
  $region13: #{forward.1} parent=0 // pred_fallthru
    _
  %p14 = scmp.eq.s32.totalorder 0, 0
  // Predicated region
  $region14: #{forward.1} parent=0 // pred_check
    %p15 = pneg %p14
  $region15: #{forward.1} parent=0 // pred_check_branch
    %17 = sbr.rel (%p15) target = $region17
  $region16: #{forward.1} parent=0 // pred_region
    %18 = vst [vmem:[%s3] sm:$0xff] 0.0
  $region17: #{forward.1} parent=0 // pred_fallthru
    _
  %v19 = vld [vmem:[%s3] sm:$0xff]
  %v20 = vld [vmem:[%s0] sm:$0xf]
  %v21 = vld [vmem:[%s1] sm:$0xf]
  %v22 = vld [vmem:[%s1 + $0x4] sm:$0xf]
  %v23 = vld [vmem:[%s1 + $0x8] sm:$0xf]
  %v24 = vld [vmem:[%s1 + $0xc] sm:$0xf]
  %v25 = vld [vmem:[%s1 + $0x10] sm:$0xf]
  %v26 = vld [vmem:[%s1 + $0x14] sm:$0xf]
  %v27 = vld [vmem:[%s1 + $0x18] sm:$0xf]
  %v28 = vld [vmem:[%s1 + $0x1c] sm:$0xf]
  %v29 = vld [vmem:[%s1 + $0x20] sm:$0xf]
  %v30 = vld [vmem:[%s1 + $0x24] sm:$0xf]
  %v31 = vld [vmem:[%s1 + $0x28] sm:$0xf]
  %v32 = vld [vmem:[%s1 + $0x2c] sm:$0xf]
  %v33 = vld [vmem:[%s1 + $0x30] sm:$0xf]
  %v34 = vld [vmem:[%s1 + $0x34] sm:$0xf]
  %v35 = vld [vmem:[%s1 + $0x38] sm:$0xf]
  %v36 = vld [vmem:[%s1 + $0x3c] sm:$0xf]
  %v53 = vunpack.c.l.b16 %v21
  %v54 = vunpack.c.l.b16 %v22
  %v55 = vunpack.c.l.b16 %v23
  %v56 = vunpack.c.l.b16 %v24
  %v57 = vunpack.c.l.b16 %v25
  %v58 = vunpack.c.l.b16 %v26
  %v59 = vunpack.c.l.b16 %v27
  %v60 = vunpack.c.l.b16 %v28
  %v61 = vunpack.c.l.b16 %v29
  %v62 = vunpack.c.l.b16 %v30
  %v63 = vunpack.c.l.b16 %v31
  %v64 = vunpack.c.l.b16 %v32
  %v65 = vunpack.c.l.b16 %v33
  %v66 = vunpack.c.l.b16 %v34
  %v67 = vunpack.c.l.b16 %v35
  %v68 = vunpack.c.l.b16 %v36
  %v69 = vpack.c.b16 %v54, %v53
  %v70 = vpack.c.b16 %v56, %v55
  %v71 = vpack.c.b16 %v58, %v57
  %v72 = vpack.c.b16 %v60, %v59
  %v73 = vpack.c.b16 %v62, %v61
  %v74 = vpack.c.b16 %v64, %v63
  %v75 = vpack.c.b16 %v66, %v65
  %v76 = vpack.c.b16 %v68, %v67
  %85 = vmatpush.bf16.xpose.msra.mxu0 %v76
  %86 = vmatpush.bf16.xpose.msra.mxu0 %v75
  %87 = vmatpush.bf16.xpose.msra.mxu0 %v74
  %88 = vmatpush.bf16.xpose.msra.mxu0 %v73
  %89 = vmatpush.bf16.xpose.msra.mxu0 %v72
  %90 = vmatpush.bf16.xpose.msra.mxu0 %v71
  %91 = vmatpush.bf16.xpose.msra.mxu0 %v70
  %92 = vmatpush.bf16.xpose.msra.mxu0 %v69
  %93 = vmatmul.bf16.gmra.mxu0 %v20
  %v94 = vpop.f32.mrf.mxu0
  %v95 = vadd.f32 0.0, %v94
  %v96 = vpop.f32.mrf.mxu0
  %97 = vdwg.mxu0
  %v98 = vadd.f32 %v19, %v95
  %99 = vst [vmem:[%s3] sm:$0xff] %v98
  // Predicated region
  $region18: #{forward.1} parent=0 // pred_check
    %p100 = pneg %p14
  $region19: #{forward.1} parent=0 // pred_check_branch
    %102 = sbr.rel (%p100) target = $region21
  $region20: #{forward.1} parent=0 // pred_region
    %v103 = vld [vmem:[%s3] sm:$0xff]
    %v104 = vld [vmem:[%s2] sm:$0x1]
    %v106 = vperm.slane %v104, 0
    %v108 = vadd.f32 %v103, %v106
    %109 = vst [vmem:[%s3] sm:$0xff] %v108
  $region21: #{forward.1} parent=0 // pred_fallthru
    _
  // Predicated region
  $region22: #{forward.1} parent=0 // pred_check
    _
  $region23: #{forward.1} parent=0 // pred_check_branch
    %111 = sbr.rel (0) target = $region25
  $region24: #{forward.1} parent=0 // pred_region
    _
  $region25: #{forward.1} parent=0 // pred_fallthru
    _
  // Predicated region
  $region26: #{forward.1} parent=0 // pred_check
    _
  $region27: #{forward.1} parent=0 // pred_check_branch
    %113 = sbr.rel (0) target = $region29
  $region28: #{forward.1} parent=0 // pred_region
    _
  $region29: #{forward.1} parent=0 // pred_fallthru
    _

</llo_original>
